<compile_context>
chip_gen: v7x
topology: tpu7x:2x2x1
jax: 0.10.0
libtpu: 0.0.40
codegen_flags: <defaults>
</compile_context>

<pallas_src>
import functools

import jax
import jax.numpy as jnp
from jax import lax
from jax.experimental import pallas as pl
from jax.experimental.pallas import tpu as pltpu


# --------------------------------------------------------------------------------------
# Kernel
# --------------------------------------------------------------------------------------
def _attention_kernel(heads, matmul_dtype, has_share, *refs):
    """One grid step = `block_b` batch elements; full Attention forward fused.

    Inputs : x (Bb,n,D), [share (Bb,H,n,n)], wq/wk/wv (D,dh), wout (dh,od), bout (1,od)
    Outputs: out (Bb,Hout,n,od), energy (Bb,Hout,n,n)   with Hout = H if share else 1.
    """
    if has_share:
        (x_ref, share_ref, wq_ref, wk_ref, wv_ref, wout_ref, bout_ref,
         out_ref, energy_ref) = refs
    else:
        (x_ref, wq_ref, wk_ref, wv_ref, wout_ref, bout_ref,
         out_ref, energy_ref) = refs
        share_ref = None

    Bb, n, D = x_ref.shape
    H = heads
    dh = wq_ref.shape[-1]
    od = wout_ref.shape[-1]

    def mx(a):
        # Cast MXU operands only; accumulation stays f32 via preferred_element_type.
        return a if matmul_dtype is None else a.astype(matmul_dtype)

    # ---- q/k/v projections: three lane-aligned (Bb*n, D) @ (D, dh) matmuls.
    #      (1/sqrt(dh) is pre-folded into wq on the host; weights are pre-cast.) -------
    xm = mx(x_ref[...].reshape(Bb * n, D))
    q = jnp.dot(xm, wq_ref[...], preferred_element_type=jnp.float32).reshape(Bb, n, dh)
    k = jnp.dot(xm, wk_ref[...], preferred_element_type=jnp.float32).reshape(Bb, n, dh)
    v = jnp.dot(xm, wv_ref[...], preferred_element_type=jnp.float32).reshape(Bb, n, dh)

    # ---- energy = q_scaled @ k^T : contract feature dims directly (no transpose) ----
    energy = lax.dot_general(mx(q), mx(k), (((2,), (2,)), ((0,), (0,))),
                             preferred_element_type=jnp.float32)            # (Bb, n, n)

    wout = wout_ref[...]
    bout = bout_ref[...]

    if has_share:
        # Per-head energies (returned "share"/bias for later layers) = energy + share.
        e = energy[:, None, :, :] + share_ref[...].astype(jnp.float32)      # (Bb,H,n,n)
        energy_ref[...] = e.astype(energy_ref.dtype)

        # One stacked softmax over all heads (single exp / reduce sweep).
        e = e - jnp.max(e, axis=-1, keepdims=True)
        p = jnp.exp(e)
        attn = p * pl.reciprocal(jnp.sum(p, axis=-1, keepdims=True), approx=True)

        # All heads batched into a single MXU call: (Bb, H*n, n) @ (Bb, n, dh).
        ctx = lax.dot_general(mx(attn.reshape(Bb, H * n, n)), mx(v),
                              (((2,), (1,)), ((0,), (0,))),
                              preferred_element_type=jnp.float32)           # (Bb,H*n,dh)
        out = jnp.dot(mx(ctx.reshape(Bb * H * n, dh)), wout,
                      preferred_element_type=jnp.float32) + bout            # (Bb*H*n,od)
        out_ref[...] = out.reshape(Bb, H, n, od).astype(out_ref.dtype)
    else:
        # share is None -> every head is identical: compute + store ONCE (Hout = 1).
        # The H-repeat happens outside the kernel (cheap XLA broadcast), cutting HBM
        # writeback and masked-store count by H x.
        energy_ref[...] = energy[:, None, :, :].astype(energy_ref.dtype)    # (Bb,1,n,n)

        e = energy - jnp.max(energy, axis=-1, keepdims=True)
        p = jnp.exp(e)
        attn = p * pl.reciprocal(jnp.sum(p, axis=-1, keepdims=True), approx=True)

        ctx = lax.dot_general(mx(attn), mx(v), (((2,), (1,)), ((0,), (0,))),
                              preferred_element_type=jnp.float32)           # (Bb, n, dh)
        out = jnp.dot(mx(ctx.reshape(Bb * n, dh)), wout,
                      preferred_element_type=jnp.float32) + bout            # (Bb*n, od)
        out_ref[...] = out.reshape(Bb, 1, n, od).astype(out_ref.dtype)


# --------------------------------------------------------------------------------------
# Generation-aware VMEM budget / block_b selection
# --------------------------------------------------------------------------------------
def _tpu_params():
    """Per-generation scoped-VMEM limit, Python-side VMEM budget and MXU M multiple."""
    try:
        kind = jax.devices()[0].device_kind.lower()
    except Exception:
        kind = ""
    if "v7" in kind or "7x" in kind:
        # v7x: 64 MiB physical VMEM per TensorCore -> leave headroom.
        return {"vmem_limit": 48 << 20, "budget": 42 << 20, "mxu_m": 256}
    if "v6" in kind:
        # v6e: 128 MiB physical; default scoped limit (~32 MiB) is far lower -> raise.
        return {"vmem_limit": 100 << 20, "budget": 92 << 20, "mxu_m": 256}
    if "v5" in kind or "v4" in kind:
        # v5e/v5p/v4: 128 MiB physical, 128-wide MXU.
        return {"vmem_limit": 100 << 20, "budget": 92 << 20, "mxu_m": 128}
    # Unknown generation: conservative budget, keep the compiler's default limit.
    return {"vmem_limit": None, "budget": 24 << 20, "mxu_m": 256}


def _vmem_bytes(block_b, n, D, dh, od, H, has_share, x_bytes, w_bytes,
                energy_bytes, out_bytes):
    """Approximate per-grid-step VMEM: double-buffered pipeline blocks + weight blocks
    + the live in-kernel f32 intermediates (q/k/v, energy, e/p/attn, ctx, pre-cast out)."""
    Hout = H if has_share else 1
    f32 = 4
    b = 2 * block_b * n * D * x_bytes                         # x input block
    if has_share:
        b += 2 * block_b * H * n * n * x_bytes                # share input block
    b += 2 * block_b * Hout * n * od * out_bytes              # out block
    b += 2 * block_b * Hout * n * n * energy_bytes            # energy block
    # weights (conservatively counted double-buffered even though grid-invariant)
    b += 2 * (3 * D * dh + dh * od) * w_bytes + 2 * od * f32
    # live f32 intermediates
    b += 3 * block_b * n * dh * f32                           # q, k, v
    b += block_b * n * n * f32                                # head-invariant energy
    b += 3 * block_b * Hout * n * n * f32                     # e, p, attn (share path)
    b += block_b * Hout * n * dh * f32                        # ctx
    b += block_b * Hout * n * od * f32                        # out before cast
    if w_bytes < f32:                                         # bf16 operand copies
        b += (block_b * n * D + 2 * block_b * n * dh
              + block_b * Hout * n * n + block_b * Hout * n * dh) * w_bytes
    return b


def _choose_block_b(B, n, H, D, dh, od, has_share, x_bytes, w_bytes,
                    energy_bytes, out_bytes, budget, mxu_m):
    divisors = [d for d in range(1, B + 1) if B % d == 0]
    fits = [d for d in divisors
            if _vmem_bytes(d, n, D, dh, od, H, has_share, x_bytes, w_bytes,
                           energy_bytes, out_bytes) <= budget] or [1]

    def score(bb):
        steps = B // bb
        m = bb * n                      # M of the batched qkv / to_out matmuls
        return (m % mxu_m == 0 or m >= 4 * mxu_m,   # MXU-filling M (128 v5e, 256 v6e+)
                steps >= 2,                          # work for both TCs (v7x megacore)
                steps % 2 == 0,                      # even split across 2 TCs
                bb)                                  # amortize ~0.35us/step overhead

    return max(fits, key=score)


# --------------------------------------------------------------------------------------
# Wrapper
# --------------------------------------------------------------------------------------
def attention_forward(x, params, heads, share=None, *,
                      block_b=None, matmul_dtype="auto",
                      energy_dtype=jnp.float32):
    """Fused Attention.forward (matches the PyTorch module).

    x      : (B, n, dim); share: None or (B, heads, n, n) additive bias on the energies.
    params : wqkv (dim, 3*inner_dim) [to_qkv weight, pre-transposed, no bias],
             wout (inner_dim, out_dim), bout (1, out_dim) [to_out].
    Returns (out (B, heads, n, out_dim), energy (B, heads, n, n)).
    """
    B, n, D = x.shape
    wqkv, wout, bout = params["wqkv"], params["wout"], params["bout"]
    dh = wqkv.shape[-1] // 3
    od = wout.shape[-1]
    H = heads
    scale = float(dh) ** -0.5
    has_share = share is not None
    Hout = H if has_share else 1
    if has_share:
        assert share.shape == (B, H, n, n), share.shape

    # bf16 MXU operands only pay off once the matmuls are big enough to be MXU-bound;
    # at toy sizes the extra f32->bf16 casts would sit on the VALU critical path.
    if matmul_dtype == "auto":
        matmul_dtype = jnp.bfloat16 if max(D, dh, n) >= 128 else None

    # Split to_qkv into lane-aligned per-projection weights, fold 1/sqrt(dh) into wq,
    # and pre-cast weights to the matmul dtype (no per-step casts, half the weight
    # VMEM/DMA when bf16).  TODO(synk): ideally done once at parameter-load time.
    wdt = jnp.float32 if matmul_dtype is None else matmul_dtype
    wq = (wqkv[:, :dh] * scale).astype(wdt)
    wk = wqkv[:, dh:2 * dh].astype(wdt)
    wv = wqkv[:, 2 * dh:].astype(wdt)
    wo = wout.astype(wdt)
    bo = bout.reshape(1, od).astype(jnp.float32)

    hw = _tpu_params()
    if block_b is None:
        block_b = _choose_block_b(B, n, H, D, dh, od, has_share,
                                  x.dtype.itemsize, wq.dtype.itemsize,
                                  jnp.dtype(energy_dtype).itemsize,
                                  x.dtype.itemsize,
                                  hw["budget"], hw["mxu_m"])
    assert B % block_b == 0, (B, block_b)
    grid = (B // block_b,)

    def rep(arr):  # grid-invariant whole-array operand (same block every step)
        ndim = arr.ndim
        return pl.BlockSpec(arr.shape, lambda b: (0,) * ndim)

    in_specs = [pl.BlockSpec((block_b, n, D), lambda b: (b, 0, 0))]
    args = [x]
    if has_share:
        in_specs.append(pl.BlockSpec((block_b, H, n, n), lambda b: (b, 0, 0, 0)))
        args.append(share)
    in_specs += [rep(wq), rep(wk), rep(wv), rep(wo), rep(bo)]
    args += [wq, wk, wv, wo, bo]

    out_specs = [
        pl.BlockSpec((block_b, Hout, n, od), lambda b: (b, 0, 0, 0)),
        pl.BlockSpec((block_b, Hout, n, n), lambda b: (b, 0, 0, 0)),
    ]
    out_shape = [
        jax.ShapeDtypeStruct((B, Hout, n, od), x.dtype),
        # Energy feeds back as next layer's additive "share"; f32 by default.
        # (energy_dtype=jnp.bfloat16 halves the dominant HBM writeback on v5e.)
        jax.ShapeDtypeStruct((B, Hout, n, n), energy_dtype),
    ]

    cp_kwargs = dict(dimension_semantics=("parallel",))
    if hw["vmem_limit"] is not None:
        cp_kwargs["vmem_limit_bytes"] = hw["vmem_limit"]

    kernel = functools.partial(_attention_kernel, H, matmul_dtype, has_share)
    out, energy = pl.pallas_call(
        kernel,
        grid=grid,
        in_specs=in_specs,
        out_specs=out_specs,
        out_shape=out_shape,
        compiler_params=pltpu.CompilerParams(**cp_kwargs),
    )(*args)

    if not has_share:
        # share=None: every head is identical -> the kernel emitted H=1; the cheap
        # H-repeat happens here in XLA (keeps the PyTorch return shapes).
        out = jnp.broadcast_to(out, (B, H, n, od))
        energy = jnp.broadcast_to(energy, (B, H, n, n))
    return out, energy


# --------------------------------------------------------------------------------------
# Pure-JAX reference (mirrors the PyTorch module) and self-test
# --------------------------------------------------------------------------------------
def _reference(x, params, heads, share=None):
    wqkv, wout, bout = params["wqkv"], params["wout"], params["bout"]
    dh = wqkv.shape[-1] // 3
    qkv = x @ wqkv
    q, k, v = qkv[..., :dh], qkv[..., dh:2 * dh], qkv[..., 2 * dh:]
    energy = jnp.einsum('bid,bjd->bij', q, k) * (float(dh) ** -0.5)
    energy = jnp.repeat(energy[:, None], heads, axis=1)
    if share is not None:
        energy = energy + share
    attn = jax.nn.softmax(energy, axis=-1)
    out = jnp.einsum('bhij,bjd->bhid', attn, v)
    out = out @ wout + bout.reshape(-1)
    return out, energy


if __name__ == "__main__":
    B, N = 2, 16
    dim, inner_dim, out_dim, heads = 32, 16, 32, 4

    key = jax.random.PRNGKey(0)
    kx, kq, ko, kb = jax.random.split(key, 4)
    x = jax.random.normal(kx, (B, N, dim), dtype=jnp.float32)
    params = {
        "wqkv": 0.05 * jax.random.normal(kq, (dim, 3 * inner_dim), dtype=jnp.float32),
        "wout": 0.05 * jax.random.normal(ko, (inner_dim, out_dim), dtype=jnp.float32),
        "bout": 0.05 * jax.random.normal(kb, (1, out_dim), dtype=jnp.float32),
    }

    # First layer: share=None (single-head compute in the kernel, H-repeat outside).
    out0, energy0 = attention_forward(x, params, heads, share=None)
    # Later layer: the returned energies come back as the additive "share" bias.
    out1, energy1 = attention_forward(x, params, heads, share=energy0)
    jax.block_until_ready((out0, energy0, out1, energy1))

    assert out0.shape == (B, heads, N, out_dim)
    assert energy0.shape == (B, heads, N, N)
    assert out1.shape == (B, heads, N, out_dim)
    assert energy1.shape == (B, heads, N, N)
    assert bool(jnp.all(jnp.isfinite(out0))) and bool(jnp.all(jnp.isfinite(out1)))

    # Correctness vs a pure-JAX reference (loose tol: approx reciprocal in softmax).
    ro0, re0 = _reference(x, params, heads, share=None)
    ro1, re1 = _reference(x, params, heads, share=re0)
    for got, ref in ((out0, ro0), (energy0, re0), (out1, ro1), (energy1, re1)):
        assert jnp.allclose(got, ref, rtol=2e-2, atol=2e-2), \
            float(jnp.max(jnp.abs(got - ref)))

    print("KERNEL_OK")
</pallas_src>

<mosaic_0001>
module attributes {stable_mosaic.version = 11 : i64} {
  func.func @_attention_kernel(%arg0: i32, %arg1: memref<1x16x32xf32, #tpu.memory_space<vmem>>, %arg2: memref<32x16xf32, #tpu.memory_space<vmem>>, %arg3: memref<32x16xf32, #tpu.memory_space<vmem>>, %arg4: memref<32x16xf32, #tpu.memory_space<vmem>>, %arg5: memref<16x32xf32, #tpu.memory_space<vmem>>, %arg6: memref<1x32xf32, #tpu.memory_space<vmem>>, %arg7: memref<1x1x16x32xf32, #tpu.memory_space<vmem>>, %arg8: memref<1x1x16x16xf32, #tpu.memory_space<vmem>>) attributes {dimension_semantics = [#tpu.dimension_semantics<parallel>], iteration_bounds = array<i64: 2>, scalar_prefetch = 0 : i64, scratch_operands = 0 : i64, tpu.core_type = #tpu.core_type<tc>, window_params = [{transform_indices = @transform_0, window_bounds = array<i64: 1, 16, 32>}, {pipeline_mode = #tpu.pipeline_mode<synchronous>, transform_indices = @transform_1, window_bounds = array<i64: 32, 16>}, {pipeline_mode = #tpu.pipeline_mode<synchronous>, transform_indices = @transform_2, window_bounds = array<i64: 32, 16>}, {pipeline_mode = #tpu.pipeline_mode<synchronous>, transform_indices = @transform_3, window_bounds = array<i64: 32, 16>}, {pipeline_mode = #tpu.pipeline_mode<synchronous>, transform_indices = @transform_4, window_bounds = array<i64: 16, 32>}, {pipeline_mode = #tpu.pipeline_mode<synchronous>, transform_indices = @transform_5, window_bounds = array<i64: 1, 32>}, {transform_indices = @transform_6, window_bounds = array<i64: 1, 1, 16, 32>}, {transform_indices = @transform_7, window_bounds = array<i64: 1, 1, 16, 16>}]} {
    %c0 = arith.constant 0 : index
    %c0_0 = arith.constant 0 : index
    %c0_1 = arith.constant 0 : index
    %0 = vector.load %arg1[%c0, %c0_0, %c0_1] : memref<1x16x32xf32, #tpu.memory_space<vmem>>, vector<1x16x32xf32>
    %1 = vector.shape_cast %0 : vector<1x16x32xf32> to vector<16x32xf32>
    %c0_2 = arith.constant 0 : index
    %c0_3 = arith.constant 0 : index
    %2 = vector.load %arg2[%c0_2, %c0_3] : memref<32x16xf32, #tpu.memory_space<vmem>>, vector<32x16xf32>
    %cst = arith.constant dense<0.000000e+00> : vector<16x16xf32>
    %3 = tpu.matmul %1, %2, %cst {dimension_numbers = #tpu.dot_dimension_numbers<[1], [0], [0], [1], [0, 0, 1, 1], [], []>} : vector<16x32xf32>, vector<32x16xf32>, vector<16x16xf32> -> vector<16x16xf32>
    %4 = vector.shape_cast %3 : vector<16x16xf32> to vector<1x16x16xf32>
    %c0_4 = arith.constant 0 : index
    %c0_5 = arith.constant 0 : index
    %5 = vector.load %arg3[%c0_4, %c0_5] : memref<32x16xf32, #tpu.memory_space<vmem>>, vector<32x16xf32>
    %cst_6 = arith.constant dense<0.000000e+00> : vector<16x16xf32>
    %6 = tpu.matmul %1, %5, %cst_6 {dimension_numbers = #tpu.dot_dimension_numbers<[1], [0], [0], [1], [0, 0, 1, 1], [], []>} : vector<16x32xf32>, vector<32x16xf32>, vector<16x16xf32> -> vector<16x16xf32>
    %7 = vector.shape_cast %6 : vector<16x16xf32> to vector<1x16x16xf32>
    %c0_7 = arith.constant 0 : index
    %c0_8 = arith.constant 0 : index
    %8 = vector.load %arg4[%c0_7, %c0_8] : memref<32x16xf32, #tpu.memory_space<vmem>>, vector<32x16xf32>
    %cst_9 = arith.constant dense<0.000000e+00> : vector<16x16xf32>
    %9 = tpu.matmul %1, %8, %cst_9 {dimension_numbers = #tpu.dot_dimension_numbers<[1], [0], [0], [1], [0, 0, 1, 1], [], []>} : vector<16x32xf32>, vector<32x16xf32>, vector<16x16xf32> -> vector<16x16xf32>
    %10 = vector.shape_cast %9 : vector<16x16xf32> to vector<1x16x16xf32>
    %cst_10 = arith.constant dense<0.000000e+00> : vector<1x16x16xf32>
    %11 = tpu.matmul %4, %7, %cst_10 {dimension_numbers = #tpu.dot_dimension_numbers<[2], [2], [1], [1], [0, 0, 0, 1, 1, 1], [0], [0]>} : vector<1x16x16xf32>, vector<1x16x16xf32>, vector<1x16x16xf32> -> vector<1x16x16xf32>
    %c0_11 = arith.constant 0 : index
    %c0_12 = arith.constant 0 : index
    %12 = vector.load %arg5[%c0_11, %c0_12] : memref<16x32xf32, #tpu.memory_space<vmem>>, vector<16x32xf32>
    %c0_13 = arith.constant 0 : index
    %c0_14 = arith.constant 0 : index
    %13 = vector.load %arg6[%c0_13, %c0_14] : memref<1x32xf32, #tpu.memory_space<vmem>>, vector<1x32xf32>
    %14 = vector.shape_cast %11 : vector<1x16x16xf32> to vector<1x1x16x16xf32>
    %c0_15 = arith.constant 0 : index
    %c0_16 = arith.constant 0 : index
    %c0_17 = arith.constant 0 : index
    %c0_18 = arith.constant 0 : index
    %15 = vector.load %arg8[%c0_15, %c0_16, %c0_17, %c0_18] : memref<1x1x16x16xf32, #tpu.memory_space<vmem>>, vector<1x1x16x16xf32>
    tpu.vector_store %arg8[%c0_15, %c0_16, %c0_17, %c0_18], %14 {strides = array<i32>} : memref<1x1x16x16xf32, #tpu.memory_space<vmem>>, vector<1x1x16x16xf32>,
    %cst_19 = arith.constant dense<0xFF800000> : vector<1x16xf32>
    %16 = vector.multi_reduction <maximumf>, %11, %cst_19 [2] : vector<1x16x16xf32> to vector<1x16xf32>
    %17 = vector.shape_cast %16 : vector<1x16xf32> to vector<1x16x1xf32>
    %18 = vector.broadcast %17 : vector<1x16x1xf32> to vector<1x16x16xf32>
    %19 = arith.subf %11, %18 : vector<1x16x16xf32>
    %20 = math.exp %19 : vector<1x16x16xf32>
    %cst_20 = arith.constant dense<0.000000e+00> : vector<1x16xf32>
    %21 = vector.multi_reduction <add>, %20, %cst_20 [2] : vector<1x16x16xf32> to vector<1x16xf32>
    %22 = vector.shape_cast %21 : vector<1x16xf32> to vector<1x16x1xf32>
    %23 = tpu.reciprocal %22 {approx = true} : vector<1x16x1xf32> -> vector<1x16x1xf32>
    %24 = vector.broadcast %23 : vector<1x16x1xf32> to vector<1x16x16xf32>
    %25 = arith.mulf %20, %24 : vector<1x16x16xf32>
    %cst_21 = arith.constant dense<0.000000e+00> : vector<1x16x16xf32>
    %26 = tpu.matmul %25, %10, %cst_21 {dimension_numbers = #tpu.dot_dimension_numbers<[2], [1], [1], [2], [0, 0, 0, 1, 1, 2], [0], [0]>} : vector<1x16x16xf32>, vector<1x16x16xf32>, vector<1x16x16xf32> -> vector<1x16x16xf32>
    %27 = vector.shape_cast %26 : vector<1x16x16xf32> to vector<16x16xf32>
    %cst_22 = arith.constant dense<0.000000e+00> : vector<16x32xf32>
    %28 = tpu.matmul %27, %12, %cst_22 {dimension_numbers = #tpu.dot_dimension_numbers<[1], [0], [0], [1], [0, 0, 1, 1], [], []>} : vector<16x16xf32>, vector<16x32xf32>, vector<16x32xf32> -> vector<16x32xf32>
    %29 = vector.broadcast %13 : vector<1x32xf32> to vector<16x32xf32>
    %30 = arith.addf %28, %29 : vector<16x32xf32>
    %31 = vector.shape_cast %30 : vector<16x32xf32> to vector<1x1x16x32xf32>
    %c0_23 = arith.constant 0 : index
    %c0_24 = arith.constant 0 : index
    %c0_25 = arith.constant 0 : index
    %c0_26 = arith.constant 0 : index
    %32 = vector.load %arg7[%c0_23, %c0_24, %c0_25, %c0_26] : memref<1x1x16x32xf32, #tpu.memory_space<vmem>>, vector<1x1x16x32xf32>
    tpu.vector_store %arg7[%c0_23, %c0_24, %c0_25, %c0_26], %31 {strides = array<i32>} : memref<1x1x16x32xf32, #tpu.memory_space<vmem>>, vector<1x1x16x32xf32>,
    return
  }
  func.func @transform_0(%arg0: i32) -> (i32, i32, i32) {
    %c0_i32 = arith.constant 0 : i32
    %c0_i32_0 = arith.constant 0 : i32
    %c0_i32_1 = arith.constant 0 : i32
    return %arg0, %c0_i32, %c0_i32_0 : i32, i32, i32
  }
  func.func @transform_1(%arg0: i32) -> (i32, i32) {
    %c0_i32 = arith.constant 0 : i32
    %c0_i32_0 = arith.constant 0 : i32
    %c0_i32_1 = arith.constant 0 : i32
    return %c0_i32, %c0_i32_0 : i32, i32
  }
  func.func @transform_2(%arg0: i32) -> (i32, i32) {
    %c0_i32 = arith.constant 0 : i32
    %c0_i32_0 = arith.constant 0 : i32
    %c0_i32_1 = arith.constant 0 : i32
    return %c0_i32, %c0_i32_0 : i32, i32
  }
  func.func @transform_3(%arg0: i32) -> (i32, i32) {
    %c0_i32 = arith.constant 0 : i32
    %c0_i32_0 = arith.constant 0 : i32
    %c0_i32_1 = arith.constant 0 : i32
    return %c0_i32, %c0_i32_0 : i32, i32
  }
  func.func @transform_4(%arg0: i32) -> (i32, i32) {
    %c0_i32 = arith.constant 0 : i32
    %c0_i32_0 = arith.constant 0 : i32
    %c0_i32_1 = arith.constant 0 : i32
    return %c0_i32, %c0_i32_0 : i32, i32
  }
  func.func @transform_5(%arg0: i32) -> (i32, i32) {
    %c0_i32 = arith.constant 0 : i32
    %c0_i32_0 = arith.constant 0 : i32
    %c0_i32_1 = arith.constant 0 : i32
    return %c0_i32, %c0_i32_0 : i32, i32
  }
  func.func @transform_6(%arg0: i32) -> (i32, i32, i32, i32) {
    %c0_i32 = arith.constant 0 : i32
    %c0_i32_0 = arith.constant 0 : i32
    %c0_i32_1 = arith.constant 0 : i32
    %c0_i32_2 = arith.constant 0 : i32
    return %arg0, %c0_i32, %c0_i32_0, %c0_i32_1 : i32, i32, i32, i32
  }
  func.func @transform_7(%arg0: i32) -> (i32, i32, i32, i32) {
    %c0_i32 = arith.constant 0 : i32
    %c0_i32_0 = arith.constant 0 : i32
    %c0_i32_1 = arith.constant 0 : i32
    %c0_i32_2 = arith.constant 0 : i32
    return %arg0, %c0_i32, %c0_i32_0, %c0_i32_1 : i32, i32, i32, i32
  }
}

</mosaic_0001>

<llo_original>
// kernel: tpu_custom_call.1
$region0: #{tpu_custom_call.1}
  #allocation0 [shape = 'u32[]', space=smem, size = 0x4, offset = 0x4, fixed_abs, tag = 'smem constant byte address 0x4 - core index']
  #allocation1 [shape = 'u32[144,128]{1,0:T(1,128)}', space=vmem, size = 0x12000, scoped, tag = 'internal scratch']
  %s0 = inlined_call_operand.vmem [shape: f32[2,16,32], index: 0, kind: input, shape index: {}]
  %s1 = inlined_call_operand.vmem [shape: f32[32,16], index: 1, kind: input, shape index: {}]
  %s2 = inlined_call_operand.vmem [shape: f32[32,16], index: 2, kind: input, shape index: {}]
  %s3 = inlined_call_operand.vmem [shape: f32[32,16], index: 3, kind: input, shape index: {}]
  %s4 = inlined_call_operand.vmem [shape: f32[16,32], index: 4, kind: input, shape index: {}]
  %s5 = inlined_call_operand.vmem [shape: f32[1,32], index: 5, kind: input, shape index: {}]
  %s6 = inlined_call_operand.hbm [shape: f32[2,1,16,32], index: 6, kind: output, shape index: {0}]
  %s7 = inlined_call_operand.hbm [shape: f32[2,1,16,16], index: 7, kind: output, shape index: {1}]
  %8 = xla_tuple %s6, %s7
  %s9 = sld [smem:[#allocation0]]
  $region65: #{tpu_custom_call.1} parent=0
    _
  %s11 = ssub.s32 1, %s9
  %s12 = scalar_select 0, %s11, %s9
  $region1: #{tpu_custom_call.1} parent=0
    #allocation2 [shape = 'u8[16384]{0}', space=vmem, size = 0x4000, scoped, tag = 'output window, operand 0']
    #allocation3 [shape = 's32[2]{0}', space=sflag, size = 0x8, scoped, tag = 'scoped memory for tpu_custom_call.1']
    #allocation4 [shape = 'u8[16384]{0}', space=vmem, size = 0x4000, scoped, tag = 'output window, operand 1']
    #allocation5 [shape = 's32[2]{0}', space=sflag, size = 0x8, scoped, tag = 'scoped memory for tpu_custom_call.1']
    %13 = vsyncpa [#allocation3], 0
    %s14 = scalar_lea.sflag [#allocation3], 1
    %15 = vsyncpa %s14, 0
    %16 = vsyncpa [#allocation5], 0
    %s17 = scalar_lea.sflag [#allocation5], 1
    %18 = vsyncpa %s17, 0
    loop: start=0, step=1, limit=4
    $region2: #{tpu_custom_call.1} parent=1 // loop_pre_header
      _
    $region3: #{tpu_custom_call.1} parent=1 // loop_header
      %s20 = sphi 0, %s24
      %p21 = scmp.ge.s32.totalorder %s20, 4
      %s30 = sphi 0, %s32
      %s33 = sphi 0, %s30
      %s34 = sphi 0, %s33
      %s50 = sphi 0, %s34
      %s54 = sphi 0, %s54
      %s56 = sphi 0, %s54
      %s57 = sphi 0, %s56
      %s71 = sphi 0, %s57
      %s75 = sphi 0, %s75
      %s77 = sphi 0, %s75
      %s78 = sphi 0, %s77
      %s92 = sphi 0, %s78
      %s96 = sphi 0, %s96
      %s98 = sphi 0, %s96
      %s99 = sphi 0, %s98
      %s113 = sphi 0, %s99
      %s117 = sphi 0, %s117
      %s119 = sphi 0, %s117
      %s120 = sphi 0, %s119
      %s134 = sphi 0, %s120
      %s138 = sphi 0, %s138
      %s140 = sphi 0, %s138
      %s141 = sphi 0, %s140
      %s155 = sphi 0, %s141
      %s161 = sphi 0, %s163
      %s164 = sphi 0, %s161
      %s165 = sphi 0, %s164
      %s181 = sphi 0, %s165
      %s187 = sphi 0, %s189
      %s190 = sphi 0, %s187
      %s191 = sphi 0, %s190
      %s207 = sphi 0, %s191
    $region4: #{tpu_custom_call.1} parent=1 // loop_header_branch
      %23 = sbr.rel (%p21) target = $region8
    $region5: #{tpu_custom_call.1} parent=1 // loop_body
      %s25 = ssub.s32 %s20, 1
      %s26 = ssub.s32 %s20, 2
      %s27 = sadd.s32 %s20, 1
      %s28 = ssub.s32 %s20, %s27
      %p29 = scmp.eq.s32.totalorder %s28, 0
      %s31 = sadd.s32 %s30, 1
      %s32 = scalar_select %p29, %s30, %s31
      %p35 = pneg %p29
      %p36 = scmp.eq.s32.totalorder %s20, 1
      %p37 = por %p35, %p36
      %p38 = scmp.ne.s32.totalorder %s30, %s33
      %p39 = scmp.eq.s32.totalorder %s20, 0
      %p40 = por %p38, %p39
      %p41 = scmp.ne.s32.totalorder %s30, %s33
      %p42 = scmp.eq.s32.totalorder %s25, 1
      %p43 = por %p41, %p42
      %p44 = scmp.ne.s32.totalorder %s33, %s34
      %p45 = scmp.eq.s32.totalorder %s25, 0
      %p46 = por %p44, %p45
      %p47 = scmp.ne.s32.totalorder %s33, %s34
      %p48 = scmp.eq.s32.totalorder %s26, 1
      %p49 = por %p47, %p48
      %p51 = scmp.ne.s32.totalorder %s34, %s50
      %p52 = scmp.eq.s32.totalorder %s26, 0
      %p53 = por %p51, %p52
      %s55 = sadd.s32 %s54, 1
      %p58 = scmp.eq.s32.totalorder %s20, 1
      %p59 = scmp.ne.s32.totalorder %s54, %s56
      %p60 = scmp.eq.s32.totalorder %s20, 0
      %p61 = por %p59, %p60
      %p62 = scmp.ne.s32.totalorder %s54, %s56
      %p63 = scmp.eq.s32.totalorder %s25, 1
      %p64 = por %p62, %p63
      %p65 = scmp.ne.s32.totalorder %s56, %s57
      %p66 = scmp.eq.s32.totalorder %s25, 0
      %p67 = por %p65, %p66
      %p68 = scmp.ne.s32.totalorder %s56, %s57
      %p69 = scmp.eq.s32.totalorder %s26, 1
      %p70 = por %p68, %p69
      %p72 = scmp.ne.s32.totalorder %s57, %s71
      %p73 = scmp.eq.s32.totalorder %s26, 0
      %p74 = por %p72, %p73
      %s76 = sadd.s32 %s75, 1
      %p79 = scmp.eq.s32.totalorder %s20, 1
      %p80 = scmp.ne.s32.totalorder %s75, %s77
      %p81 = scmp.eq.s32.totalorder %s20, 0
      %p82 = por %p80, %p81
      %p83 = scmp.ne.s32.totalorder %s75, %s77
      %p84 = scmp.eq.s32.totalorder %s25, 1
      %p85 = por %p83, %p84
      %p86 = scmp.ne.s32.totalorder %s77, %s78
      %p87 = scmp.eq.s32.totalorder %s25, 0
      %p88 = por %p86, %p87
      %p89 = scmp.ne.s32.totalorder %s77, %s78
      %p90 = scmp.eq.s32.totalorder %s26, 1
      %p91 = por %p89, %p90
      %p93 = scmp.ne.s32.totalorder %s78, %s92
      %p94 = scmp.eq.s32.totalorder %s26, 0
      %p95 = por %p93, %p94
      %s97 = sadd.s32 %s96, 1
      %p100 = scmp.eq.s32.totalorder %s20, 1
      %p101 = scmp.ne.s32.totalorder %s96, %s98
      %p102 = scmp.eq.s32.totalorder %s20, 0
      %p103 = por %p101, %p102
      %p104 = scmp.ne.s32.totalorder %s96, %s98
      %p105 = scmp.eq.s32.totalorder %s25, 1
      %p106 = por %p104, %p105
      %p107 = scmp.ne.s32.totalorder %s98, %s99
      %p108 = scmp.eq.s32.totalorder %s25, 0
      %p109 = por %p107, %p108
      %p110 = scmp.ne.s32.totalorder %s98, %s99
      %p111 = scmp.eq.s32.totalorder %s26, 1
      %p112 = por %p110, %p111
      %p114 = scmp.ne.s32.totalorder %s99, %s113
      %p115 = scmp.eq.s32.totalorder %s26, 0
      %p116 = por %p114, %p115
      %s118 = sadd.s32 %s117, 1
      %p121 = scmp.eq.s32.totalorder %s20, 1
      %p122 = scmp.ne.s32.totalorder %s117, %s119
      %p123 = scmp.eq.s32.totalorder %s20, 0
      %p124 = por %p122, %p123
      %p125 = scmp.ne.s32.totalorder %s117, %s119
      %p126 = scmp.eq.s32.totalorder %s25, 1
      %p127 = por %p125, %p126
      %p128 = scmp.ne.s32.totalorder %s119, %s120
      %p129 = scmp.eq.s32.totalorder %s25, 0
      %p130 = por %p128, %p129
      %p131 = scmp.ne.s32.totalorder %s119, %s120
      %p132 = scmp.eq.s32.totalorder %s26, 1
      %p133 = por %p131, %p132
      %p135 = scmp.ne.s32.totalorder %s120, %s134
      %p136 = scmp.eq.s32.totalorder %s26, 0
      %p137 = por %p135, %p136
      %s139 = sadd.s32 %s138, 1
      %p142 = scmp.eq.s32.totalorder %s20, 1
      %p143 = scmp.ne.s32.totalorder %s138, %s140
      %p144 = scmp.eq.s32.totalorder %s20, 0
      %p145 = por %p143, %p144
      %p146 = scmp.ne.s32.totalorder %s138, %s140
      %p147 = scmp.eq.s32.totalorder %s25, 1
      %p148 = por %p146, %p147
      %p149 = scmp.ne.s32.totalorder %s140, %s141
      %p150 = scmp.eq.s32.totalorder %s25, 0
      %p151 = por %p149, %p150
      %p152 = scmp.ne.s32.totalorder %s140, %s141
      %p153 = scmp.eq.s32.totalorder %s26, 1
      %p154 = por %p152, %p153
      %p156 = scmp.ne.s32.totalorder %s141, %s155
      %p157 = scmp.eq.s32.totalorder %s26, 0
      %p158 = por %p156, %p157
      %s159 = ssub.s32 %s20, %s27
      %p160 = scmp.eq.s32.totalorder %s159, 0
      %s162 = sadd.s32 %s161, 1
      %s163 = scalar_select %p160, %s161, %s162
      %p166 = pneg %p160
      %p167 = scmp.eq.s32.totalorder %s20, 1
      %p168 = por %p166, %p167
      %p169 = scmp.ne.s32.totalorder %s161, %s164
      %p170 = scmp.eq.s32.totalorder %s20, 0
      %p171 = por %p169, %p170
      %p172 = scmp.ne.s32.totalorder %s161, %s164
      %p173 = scmp.eq.s32.totalorder %s25, 1
      %p174 = por %p172, %p173
      %p175 = scmp.ne.s32.totalorder %s164, %s165
      %p176 = scmp.eq.s32.totalorder %s25, 0
      %p177 = por %p175, %p176
      %p178 = scmp.ne.s32.totalorder %s164, %s165
      %p179 = scmp.eq.s32.totalorder %s26, 1
      %p180 = por %p178, %p179
      %p182 = scmp.ne.s32.totalorder %s165, %s181
      %p183 = scmp.eq.s32.totalorder %s26, 0
      %p184 = por %p182, %p183
      %s185 = ssub.s32 %s20, %s27
      %p186 = scmp.eq.s32.totalorder %s185, 0
      %s188 = sadd.s32 %s187, 1
      %s189 = scalar_select %p186, %s187, %s188
      %p192 = pneg %p186
      %p193 = scmp.eq.s32.totalorder %s20, 1
      %p194 = por %p192, %p193
      %p195 = scmp.ne.s32.totalorder %s187, %s190
      %p196 = scmp.eq.s32.totalorder %s20, 0
      %p197 = por %p195, %p196
      %p198 = scmp.ne.s32.totalorder %s187, %s190
      %p199 = scmp.eq.s32.totalorder %s25, 1
      %p200 = por %p198, %p199
      %p201 = scmp.ne.s32.totalorder %s190, %s191
      %p202 = scmp.eq.s32.totalorder %s25, 0
      %p203 = por %p201, %p202
      %p204 = scmp.ne.s32.totalorder %s190, %s191
      %p205 = scmp.eq.s32.totalorder %s26, 1
      %p206 = por %p204, %p205
      %p208 = scmp.ne.s32.totalorder %s191, %s207
      %p209 = scmp.eq.s32.totalorder %s26, 0
      %p210 = por %p208, %p209
      %p211 = scmp.le.s32.totalorder 1, %s20
      %p212 = scmp.lt.s32.totalorder %s20, 3
      %p213 = pnand %p211, %p212
      %p214 = pneg %p213
      // Predicated region
      $region9: #{tpu_custom_call.1} parent=5 // pred_check
        _
      $region10: #{tpu_custom_call.1} parent=5 // pred_check_branch
        %216 = sbr.rel (%p213) target = $region12
      $region11: #{tpu_custom_call.1} parent=5 // pred_region
        %s217 = ssub.s32 %s20, 1
        // Predicated region
        $region13: #{tpu_custom_call.1} parent=11 // pred_check
          %p218 = pneg %p67
        $region14: #{tpu_custom_call.1} parent=11 // pred_check_branch
          %220 = sbr.rel (%p218) target = $region16
        $region15: #{tpu_custom_call.1} parent=11 // pred_region
          _
        $region16: #{tpu_custom_call.1} parent=11 // pred_fallthru
          _
        // Predicated region
        $region17: #{tpu_custom_call.1} parent=11 // pred_check
          %p221 = pneg %p88
        $region18: #{tpu_custom_call.1} parent=11 // pred_check_branch
          %223 = sbr.rel (%p221) target = $region20
        $region19: #{tpu_custom_call.1} parent=11 // pred_region
          _
        $region20: #{tpu_custom_call.1} parent=11 // pred_fallthru
          _
        // Predicated region
        $region21: #{tpu_custom_call.1} parent=11 // pred_check
          %p224 = pneg %p109
        $region22: #{tpu_custom_call.1} parent=11 // pred_check_branch
          %226 = sbr.rel (%p224) target = $region24
        $region23: #{tpu_custom_call.1} parent=11 // pred_region
          _
        $region24: #{tpu_custom_call.1} parent=11 // pred_fallthru
          _
        // Predicated region
        $region25: #{tpu_custom_call.1} parent=11 // pred_check
          %p227 = pneg %p130
        $region26: #{tpu_custom_call.1} parent=11 // pred_check_branch
          %229 = sbr.rel (%p227) target = $region28
        $region27: #{tpu_custom_call.1} parent=11 // pred_region
          _
        $region28: #{tpu_custom_call.1} parent=11 // pred_fallthru
          _
        // Predicated region
        $region29: #{tpu_custom_call.1} parent=11 // pred_check
          %p230 = pneg %p151
        $region30: #{tpu_custom_call.1} parent=11 // pred_check_branch
          %232 = sbr.rel (%p230) target = $region32
        $region31: #{tpu_custom_call.1} parent=11 // pred_region
          _
        $region32: #{tpu_custom_call.1} parent=11 // pred_fallthru
          _
      $region12: #{tpu_custom_call.1} parent=5 // pred_fallthru
        _
      %p233 = scmp.lt.s32.totalorder %s20, 2
      // Predicated region
      $region33: #{tpu_custom_call.1} parent=5 // pred_check
        %p234 = pneg %p233
      $region34: #{tpu_custom_call.1} parent=5 // pred_check_branch
        %236 = sbr.rel (%p234) target = $region36
      $region35: #{tpu_custom_call.1} parent=5 // pred_region
        // Predicated region
        $region37: #{tpu_custom_call.1} parent=35 // pred_check
          %p237 = pneg %p40
        $region38: #{tpu_custom_call.1} parent=35 // pred_check_branch
          %239 = sbr.rel (%p237) target = $region40
        $region39: #{tpu_custom_call.1} parent=35 // pred_region
          %p240 = scmp.lt.s32.totalorder %s20, 1
          %s241 = scalar_select %p240, %s20, 1
          %s242 = smul.addr %s241, 2
          %s243 = smul.addr %s242, 8
          %s244 = scalar_lea.vmem %s0, %s243
        $region40: #{tpu_custom_call.1} parent=35 // pred_fallthru
          _
      $region36: #{tpu_custom_call.1} parent=5 // pred_fallthru
        _
      %p245 = scmp.le.s32.totalorder 1, %s20
      %p246 = scmp.lt.s32.totalorder %s20, 3
      %p247 = pnand %p245, %p246
      %p248 = pneg %p247
      // Predicated region
      $region41: #{tpu_custom_call.1} parent=5 // pred_check
        _
      $region42: #{tpu_custom_call.1} parent=5 // pred_check_branch
        %250 = sbr.rel (%p247) target = $region44
      $region43: #{tpu_custom_call.1} parent=5 // pred_region
        %s251 = ssub.s32 %s20, 1
        %p252 = scmp.lt.s32.totalorder %s25, 1
        %s253 = scalar_select %p252, %s25, 1
        %s254 = smul.addr %s253, 2
        %s255 = smul.addr %s254, 8
        %s256 = scalar_lea.vmem %s0, %s255
        %p257 = pneg %p46
        %p258 = pneg %p43
        %p259 = pneg %p67
        %p260 = pneg %p64
        %p261 = pneg %p88
        %p262 = pneg %p85
        %p263 = pneg %p109
        %p264 = pneg %p106
        %p265 = pneg %p130
        %p266 = pneg %p127
        %p267 = pneg %p151
        %p268 = pneg %p148
        %p269 = pneg %p177
        %p270 = pneg %p174
        %s271 = sand.u32 %s164, 1
        %s272 = scalar_lea.sflag [#allocation3], %s271
        %s273 = sand.u32 %s164, 1
        %s274 = smul.addr %s273, 16
        %s275 = scalar_lea.vmem [#allocation2], %s274
        %p276 = pneg %p203
        %p277 = pneg %p200
        %s278 = sand.u32 %s190, 1
        %s279 = scalar_lea.sflag [#allocation5], %s278
        %s280 = sand.u32 %s190, 1
        %s281 = smul.addr %s280, 16
        %s282 = scalar_lea.vmem [#allocation4], %s281
        %p283 = scmp.lt.s32.totalorder %s25, 1
        %s284 = scalar_select %p283, %s25, 1
        %s285 = smul.addr %s284, 2
        %s286 = smul.addr %s285, 8
        %s287 = scalar_lea.vmem %s0, %s286
        %v288 = vld [vmem:[%s287] sm:$0xff]
        %v289 = vld [vmem:[%s287 + $0x8] sm:$0xff]
        %v290 = vld [vmem:[%s1] sm:$0xff]
        %v291 = vld [vmem:[%s1 + $0x8] sm:$0xff]
        %v292 = vld [vmem:[%s1 + $0x10] sm:$0xff]
        %v293 = vld [vmem:[%s1 + $0x18] sm:$0xff]
        %vm294 = vcmask 261120
        %v296 = vsel %vm294, %v288, 0
        %v299 = vsel %vm294, %v289, 0
        %301 = vmatprep.subr.mxu0 0.0
        %302 = vmatpush1.msra.mxu0 %v290
        %303 = vmatprep.subr.mxu0 0.0
        %304 = vmatpush1.msra.mxu0 %v291
        %305 = vmatprep.subr.mxu0 0.0
        %306 = vmatpush1.msra.mxu0 %v292
        %307 = vmatprep.subr.mxu0 0.0
        %308 = vmatpush1.msra.mxu0 %v293
        %309 = vmatprep.subr.mxu0 0.0
        %310 = vmatpush1.msra.mxu0 0.0
        %311 = vmatprep.subr.mxu0 0.0
        %312 = vmatpush1.msra.mxu0 0.0
        %313 = vmatprep.subr.mxu0 0.0
        %314 = vmatpush1.msra.mxu0 0.0
        %315 = vmatprep.subr.mxu0 0.0
        %316 = vmatpush1.msra.mxu0 0.0
        %317 = vmatprep.subr.mxu0 0.0
        %318 = vmatpush1.msra.mxu0 0.0
        %319 = vmatprep.subr.mxu0 0.0
        %320 = vmatpush1.msra.mxu0 0.0
        %321 = vmatprep.subr.mxu0 0.0
        %322 = vmatpush1.msra.mxu0 0.0
        %323 = vmatprep.subr.mxu0 0.0
        %324 = vmatpush1.msra.mxu0 0.0
        %325 = vmatprep.subr.mxu0 0.0
        %326 = vmatpush1.msra.mxu0 0.0
        %327 = vmatprep.subr.mxu0 0.0
        %328 = vmatpush1.msra.mxu0 0.0
        %329 = vmatprep.subr.mxu0 0.0
        %330 = vmatpush1.msra.mxu0 0.0
        %331 = vmatprep.subr.mxu0 0.0
        %332 = vmatpush1.msra.mxu0 0.0
        %333 = vmatprep.subr.mxu0 0.0
        %334 = vmatpush1.msra.mxu0 0.0
        %335 = vmatprep.subr.mxu0 0.0
        %336 = vmatpush1.msra.mxu0 0.0
        %337 = vmatprep.subr.mxu0 0.0
        %338 = vmatpush1.msra.mxu0 0.0
        %339 = vmatprep.subr.mxu0 0.0
        %340 = vmatpush1.msra.mxu0 0.0
        %341 = vmatprep.subr.mxu0 0.0
        %342 = vmatpush1.msra.mxu0 0.0
        %343 = vmatprep.subr.mxu0 0.0
        %344 = vmatpush1.msra.mxu0 0.0
        %345 = vmatprep.subr.mxu0 0.0
        %346 = vmatpush1.msra.mxu0 0.0
        %347 = vmatprep.subr.mxu0 0.0
        %348 = vmatpush1.msra.mxu0 0.0
        %349 = vmatprep.subr.mxu0 0.0
        %350 = vmatpush1.msra.mxu0 0.0
        %351 = vmatprep.subr.mxu0 0.0
        %352 = vmatpush1.msra.mxu0 0.0
        %353 = vmatprep.subr.mxu0 0.0
        %354 = vmatpush1.msra.mxu0 0.0
        %355 = vmatprep.subr.mxu0 0.0
        %356 = vmatpush1.msra.mxu0 0.0
        %357 = vmatprep.subr.mxu0 0.0
        %358 = vmatpush1.msra.mxu0 0.0
        %359 = vmatprep.subr.mxu0 0.0
        %360 = vmatpush1.msra.mxu0 0.0
        %361 = vmatprep.subr.mxu0 0.0
        %362 = vmatpush1.msra.mxu0 0.0
        %363 = vmatprep.subr.mxu0 0.0
        %364 = vmatpush1.msra.mxu0 0.0
        %365 = vmatprep.mubr.f32.mxu0 0.0
        %366 = vmatmul.mubr.f32.gmra.mrb[0].mxu0 %v296
        %v367 = vpop.f32.mrb[0].mxu0
        %v368 = vadd.f32 0.0, %v367
        %v369 = vpop.f32.mrb[0].mxu0
        %370 = vmatprep.mubr.f32.mxu0 0.0
        %371 = vmatmul.mubr.f32.gmra.mrb[0].mxu0 %v299
        %v372 = vpop.f32.mrb[0].mxu0
        %v373 = vadd.f32 0.0, %v372
        %v374 = vpop.f32.mrb[0].mxu0
        %375 = vdwg.mxu0
        %v376 = vld [vmem:[%s2] sm:$0xff]
        %v377 = vld [vmem:[%s2 + $0x8] sm:$0xff]
        %v378 = vld [vmem:[%s2 + $0x10] sm:$0xff]
        %v379 = vld [vmem:[%s2 + $0x18] sm:$0xff]
        %380 = vmatprep.subr.mxu0 0.0
        %381 = vmatpush1.msra.mxu0 %v376
        %382 = vmatprep.subr.mxu0 0.0
        %383 = vmatpush1.msra.mxu0 %v377
        %384 = vmatprep.subr.mxu0 0.0
        %385 = vmatpush1.msra.mxu0 %v378
        %386 = vmatprep.subr.mxu0 0.0
        %387 = vmatpush1.msra.mxu0 %v379
        %388 = vmatprep.subr.mxu0 0.0
        %389 = vmatpush1.msra.mxu0 0.0
        %390 = vmatprep.subr.mxu0 0.0
        %391 = vmatpush1.msra.mxu0 0.0
        %392 = vmatprep.subr.mxu0 0.0
        %393 = vmatpush1.msra.mxu0 0.0
        %394 = vmatprep.subr.mxu0 0.0
        %395 = vmatpush1.msra.mxu0 0.0
        %396 = vmatprep.subr.mxu0 0.0
        %397 = vmatpush1.msra.mxu0 0.0
        %398 = vmatprep.subr.mxu0 0.0
        %399 = vmatpush1.msra.mxu0 0.0
        %400 = vmatprep.subr.mxu0 0.0
        %401 = vmatpush1.msra.mxu0 0.0
        %402 = vmatprep.subr.mxu0 0.0
        %403 = vmatpush1.msra.mxu0 0.0
        %404 = vmatprep.subr.mxu0 0.0
        %405 = vmatpush1.msra.mxu0 0.0
        %406 = vmatprep.subr.mxu0 0.0
        %407 = vmatpush1.msra.mxu0 0.0
        %408 = vmatprep.subr.mxu0 0.0
        %409 = vmatpush1.msra.mxu0 0.0
        %410 = vmatprep.subr.mxu0 0.0
        %411 = vmatpush1.msra.mxu0 0.0
        %412 = vmatprep.subr.mxu0 0.0
        %413 = vmatpush1.msra.mxu0 0.0
        %414 = vmatprep.subr.mxu0 0.0
        %415 = vmatpush1.msra.mxu0 0.0
        %416 = vmatprep.subr.mxu0 0.0
        %417 = vmatpush1.msra.mxu0 0.0
        %418 = vmatprep.subr.mxu0 0.0
        %419 = vmatpush1.msra.mxu0 0.0
        %420 = vmatprep.subr.mxu0 0.0
        %421 = vmatpush1.msra.mxu0 0.0
        %422 = vmatprep.subr.mxu0 0.0
        %423 = vmatpush1.msra.mxu0 0.0
        %424 = vmatprep.subr.mxu0 0.0
        %425 = vmatpush1.msra.mxu0 0.0
        %426 = vmatprep.subr.mxu0 0.0
        %427 = vmatpush1.msra.mxu0 0.0
        %428 = vmatprep.subr.mxu0 0.0
        %429 = vmatpush1.msra.mxu0 0.0
        %430 = vmatprep.subr.mxu0 0.0
        %431 = vmatpush1.msra.mxu0 0.0
        %432 = vmatprep.subr.mxu0 0.0
        %433 = vmatpush1.msra.mxu0 0.0
        %434 = vmatprep.subr.mxu0 0.0
        %435 = vmatpush1.msra.mxu0 0.0
        %436 = vmatprep.subr.mxu0 0.0
        %437 = vmatpush1.msra.mxu0 0.0
        %438 = vmatprep.subr.mxu0 0.0
        %439 = vmatpush1.msra.mxu0 0.0
        %440 = vmatprep.subr.mxu0 0.0
        %441 = vmatpush1.msra.mxu0 0.0
        %442 = vmatprep.subr.mxu0 0.0
        %443 = vmatpush1.msra.mxu0 0.0
        %444 = vmatprep.mubr.f32.mxu0 0.0
        %445 = vmatmul.mubr.f32.gmra.mrb[0].mxu0 %v296
        %v446 = vpop.f32.mrb[0].mxu0
        %v447 = vadd.f32 0.0, %v446
        %v448 = vpop.f32.mrb[0].mxu0
        %449 = vmatprep.mubr.f32.mxu0 0.0
        %450 = vmatmul.mubr.f32.gmra.mrb[0].mxu0 %v299
        %v451 = vpop.f32.mrb[0].mxu0
        %v452 = vadd.f32 0.0, %v451
        %v453 = vpop.f32.mrb[0].mxu0
        %454 = vdwg.mxu0
        %v455 = vld [vmem:[%s3] sm:$0xff]
        %v456 = vld [vmem:[%s3 + $0x8] sm:$0xff]
        %v457 = vld [vmem:[%s3 + $0x10] sm:$0xff]
        %v458 = vld [vmem:[%s3 + $0x18] sm:$0xff]
        %459 = vmatprep.subr.mxu0 0.0
        %460 = vmatpush1.msra.mxu0 %v455
        %461 = vmatprep.subr.mxu0 0.0
        %462 = vmatpush1.msra.mxu0 %v456
        %463 = vmatprep.subr.mxu0 0.0
        %464 = vmatpush1.msra.mxu0 %v457
        %465 = vmatprep.subr.mxu0 0.0
        %466 = vmatpush1.msra.mxu0 %v458
        %467 = vmatprep.subr.mxu0 0.0
        %468 = vmatpush1.msra.mxu0 0.0
        %469 = vmatprep.subr.mxu0 0.0
        %470 = vmatpush1.msra.mxu0 0.0
        %471 = vmatprep.subr.mxu0 0.0
        %472 = vmatpush1.msra.mxu0 0.0
        %473 = vmatprep.subr.mxu0 0.0
        %474 = vmatpush1.msra.mxu0 0.0
        %475 = vmatprep.subr.mxu0 0.0
        %476 = vmatpush1.msra.mxu0 0.0
        %477 = vmatprep.subr.mxu0 0.0
        %478 = vmatpush1.msra.mxu0 0.0
        %479 = vmatprep.subr.mxu0 0.0
        %480 = vmatpush1.msra.mxu0 0.0
        %481 = vmatprep.subr.mxu0 0.0
        %482 = vmatpush1.msra.mxu0 0.0
        %483 = vmatprep.subr.mxu0 0.0
        %484 = vmatpush1.msra.mxu0 0.0
        %485 = vmatprep.subr.mxu0 0.0
        %486 = vmatpush1.msra.mxu0 0.0
        %487 = vmatprep.subr.mxu0 0.0
        %488 = vmatpush1.msra.mxu0 0.0
        %489 = vmatprep.subr.mxu0 0.0
        %490 = vmatpush1.msra.mxu0 0.0
        %491 = vmatprep.subr.mxu0 0.0
        %492 = vmatpush1.msra.mxu0 0.0
        %493 = vmatprep.subr.mxu0 0.0
        %494 = vmatpush1.msra.mxu0 0.0
        %495 = vmatprep.subr.mxu0 0.0
        %496 = vmatpush1.msra.mxu0 0.0
        %497 = vmatprep.subr.mxu0 0.0
        %498 = vmatpush1.msra.mxu0 0.0
        %499 = vmatprep.subr.mxu0 0.0
        %500 = vmatpush1.msra.mxu0 0.0
        %501 = vmatprep.subr.mxu0 0.0
        %502 = vmatpush1.msra.mxu0 0.0
        %503 = vmatprep.subr.mxu0 0.0
        %504 = vmatpush1.msra.mxu0 0.0
        %505 = vmatprep.subr.mxu0 0.0
        %506 = vmatpush1.msra.mxu0 0.0
        %507 = vmatprep.subr.mxu0 0.0
        %508 = vmatpush1.msra.mxu0 0.0
        %509 = vmatprep.subr.mxu0 0.0
        %510 = vmatpush1.msra.mxu0 0.0
        %511 = vmatprep.subr.mxu0 0.0
        %512 = vmatpush1.msra.mxu0 0.0
        %513 = vmatprep.subr.mxu0 0.0
        %514 = vmatpush1.msra.mxu0 0.0
        %515 = vmatprep.subr.mxu0 0.0
        %516 = vmatpush1.msra.mxu0 0.0
        %517 = vmatprep.subr.mxu0 0.0
        %518 = vmatpush1.msra.mxu0 0.0
        %519 = vmatprep.subr.mxu0 0.0
        %520 = vmatpush1.msra.mxu0 0.0
        %521 = vmatprep.subr.mxu0 0.0
        %522 = vmatpush1.msra.mxu0 0.0
        %523 = vmatprep.mubr.f32.mxu0 0.0
        %524 = vmatmul.mubr.f32.gmra.mrb[0].mxu0 %v296
        %v525 = vpop.f32.mrb[0].mxu0
        %v526 = vadd.f32 0.0, %v525
        %v527 = vpop.f32.mrb[0].mxu0
        %528 = vmatprep.mubr.f32.mxu0 0.0
        %529 = vmatmul.mubr.f32.gmra.mrb[0].mxu0 %v299
        %v530 = vpop.f32.mrb[0].mxu0
        %v531 = vadd.f32 0.0, %v530
        %v532 = vpop.f32.mrb[0].mxu0
        %533 = vdwg.mxu0
        %vm534 = vcmask 130048
        %v536 = vsel %vm534, %v368, 0
        %v539 = vsel %vm534, %v373, 0
        %v542 = vsel %vm534, %v447, 0
        %v545 = vsel %vm534, %v452, 0
        %547 = vmatprep.subr.mxu0 0.0
        %548 = vmatpush1.xpose.msra.mxu0 %v542
        %549 = vmatprep.subr.mxu0 0.0
        %550 = vmatpush1.xpose.msra.mxu0 %v545
        %551 = vmatprep.subr.mxu0 0.0
        %552 = vmatpush1.xpose.msra.mxu0 0.0
        %553 = vmatprep.subr.mxu0 0.0
        %554 = vmatpush1.xpose.msra.mxu0 0.0
        %555 = vmatprep.subr.mxu0 0.0
        %556 = vmatpush1.xpose.msra.mxu0 0.0
        %557 = vmatprep.subr.mxu0 0.0
        %558 = vmatpush1.xpose.msra.mxu0 0.0
        %559 = vmatprep.subr.mxu0 0.0
        %560 = vmatpush1.xpose.msra.mxu0 0.0
        %561 = vmatprep.subr.mxu0 0.0
        %562 = vmatpush1.xpose.msra.mxu0 0.0
        %563 = vmatprep.subr.mxu0 0.0
        %564 = vmatpush1.xpose.msra.mxu0 0.0
        %565 = vmatprep.subr.mxu0 0.0
        %566 = vmatpush1.xpose.msra.mxu0 0.0
        %567 = vmatprep.subr.mxu0 0.0
        %568 = vmatpush1.xpose.msra.mxu0 0.0
        %569 = vmatprep.subr.mxu0 0.0
        %570 = vmatpush1.xpose.msra.mxu0 0.0
        %571 = vmatprep.subr.mxu0 0.0
        %572 = vmatpush1.xpose.msra.mxu0 0.0
        %573 = vmatprep.subr.mxu0 0.0
        %574 = vmatpush1.xpose.msra.mxu0 0.0
        %575 = vmatprep.subr.mxu0 0.0
        %576 = vmatpush1.xpose.msra.mxu0 0.0
        %577 = vmatprep.subr.mxu0 0.0
        %578 = vmatpush1.xpose.msra.mxu0 0.0
        %579 = vmatprep.subr.mxu0 0.0
        %580 = vmatpush1.xpose.msra.mxu0 0.0
        %581 = vmatprep.subr.mxu0 0.0
        %582 = vmatpush1.xpose.msra.mxu0 0.0
        %583 = vmatprep.subr.mxu0 0.0
        %584 = vmatpush1.xpose.msra.mxu0 0.0
        %585 = vmatprep.subr.mxu0 0.0
        %586 = vmatpush1.xpose.msra.mxu0 0.0
        %587 = vmatprep.subr.mxu0 0.0
        %588 = vmatpush1.xpose.msra.mxu0 0.0
        %589 = vmatprep.subr.mxu0 0.0
        %590 = vmatpush1.xpose.msra.mxu0 0.0
        %591 = vmatprep.subr.mxu0 0.0
        %592 = vmatpush1.xpose.msra.mxu0 0.0
        %593 = vmatprep.subr.mxu0 0.0
        %594 = vmatpush1.xpose.msra.mxu0 0.0
        %595 = vmatprep.subr.mxu0 0.0
        %596 = vmatpush1.xpose.msra.mxu0 0.0
        %597 = vmatprep.subr.mxu0 0.0
        %598 = vmatpush1.xpose.msra.mxu0 0.0
        %599 = vmatprep.subr.mxu0 0.0
        %600 = vmatpush1.xpose.msra.mxu0 0.0
        %601 = vmatprep.subr.mxu0 0.0
        %602 = vmatpush1.xpose.msra.mxu0 0.0
        %603 = vmatprep.subr.mxu0 0.0
        %604 = vmatpush1.xpose.msra.mxu0 0.0
        %605 = vmatprep.subr.mxu0 0.0
        %606 = vmatpush1.xpose.msra.mxu0 0.0
        %607 = vmatprep.subr.mxu0 0.0
        %608 = vmatpush1.xpose.msra.mxu0 0.0
        %609 = vmatprep.subr.mxu0 0.0
        %610 = vmatpush1.xpose.msra.mxu0 0.0
        %611 = vmatprep.mubr.f32.mxu0 0.0
        %612 = vmatmul.mubr.f32.gmra.mrb[0].mxu0 %v536
        %v613 = vpop.f32.mrb[0].mxu0
        %v614 = vadd.f32 0.0, %v613
        %v615 = vpop.f32.mrb[0].mxu0
        %616 = vmatprep.mubr.f32.mxu0 0.0
        %617 = vmatmul.mubr.f32.gmra.mrb[0].mxu0 %v539
        %v618 = vpop.f32.mrb[0].mxu0
        %v619 = vadd.f32 0.0, %v618
        %v620 = vpop.f32.mrb[0].mxu0
        %621 = vdwg.mxu0
        %v622 = vld [vmem:[%s4] sm:$0xff]
        %v623 = vld [vmem:[%s4 + $0x8] sm:$0xff]
        %v624 = vld [vmem:[%s5] sm:$0x1]
        %625 = vst.msk [vmem:[%s282] sm:$0xff] %vm534, %v614
        %626 = vst.msk [vmem:[%s282 + $0x8] sm:$0xff] %vm534, %v619
        %v627 = vsel %vm534, %v614, -inf
        %628 = vmax.xlane.f32.xlu0 %v627
        %v629 = vpop.xlane.xlu0 %628
        %v630 = vsel %vm534, %v619, -inf
        %631 = vmax.xlane.f32.xlu0 %v630
        %v632 = vpop.xlane.xlu0 %631
        %v633 = vsub.f32 %v614, %v629
        %v634 = vsub.f32 %v619, %v632
        %v635 = vmul.f32 %v633, 1.442695
        %v636 = vpow.pop %v635
        %v637 = vmul.f32 %v634, 1.442695
        %v638 = vpow.pop %v637
        %v639 = vsel %vm534, %v636, 0.0
        %640 = vadd.xlane.f32.xlu0 %v639
        %v641 = vpop.xlane.xlu0 %640
        %v642 = vsel %vm534, %v638, 0.0
        %643 = vadd.xlane.f32.xlu0 %v642
        %v644 = vpop.xlane.xlu0 %643
        %v645 = vrcp.pop %v641
        %v646 = vrcp.pop %v644
        %v647 = vmul.f32 %v636, %v645
        %v648 = vmul.f32 %v638, %v646
        %v650 = vsel %vm534, %v647, 0
        %v653 = vsel %vm534, %v648, 0
        %655 = vmatprep.subr.mxu0 0.0
        %656 = vmatpush1.msra.mxu0 %v526
        %657 = vmatprep.subr.mxu0 0.0
        %658 = vmatpush1.msra.mxu0 %v531
        %659 = vmatprep.subr.mxu0 0.0
        %660 = vmatpush1.msra.mxu0 0.0
        %661 = vmatprep.subr.mxu0 0.0
        %662 = vmatpush1.msra.mxu0 0.0
        %663 = vmatprep.subr.mxu0 0.0
        %664 = vmatpush1.msra.mxu0 0.0
        %665 = vmatprep.subr.mxu0 0.0
        %666 = vmatpush1.msra.mxu0 0.0
        %667 = vmatprep.subr.mxu0 0.0
        %668 = vmatpush1.msra.mxu0 0.0
        %669 = vmatprep.subr.mxu0 0.0
        %670 = vmatpush1.msra.mxu0 0.0
        %671 = vmatprep.subr.mxu0 0.0
        %672 = vmatpush1.msra.mxu0 0.0
        %673 = vmatprep.subr.mxu0 0.0
        %674 = vmatpush1.msra.mxu0 0.0
        %675 = vmatprep.subr.mxu0 0.0
        %676 = vmatpush1.msra.mxu0 0.0
        %677 = vmatprep.subr.mxu0 0.0
        %678 = vmatpush1.msra.mxu0 0.0
        %679 = vmatprep.subr.mxu0 0.0
        %680 = vmatpush1.msra.mxu0 0.0
        %681 = vmatprep.subr.mxu0 0.0
        %682 = vmatpush1.msra.mxu0 0.0
        %683 = vmatprep.subr.mxu0 0.0
        %684 = vmatpush1.msra.mxu0 0.0
        %685 = vmatprep.subr.mxu0 0.0
        %686 = vmatpush1.msra.mxu0 0.0
        %687 = vmatprep.subr.mxu0 0.0
        %688 = vmatpush1.msra.mxu0 0.0
        %689 = vmatprep.subr.mxu0 0.0
        %690 = vmatpush1.msra.mxu0 0.0
        %691 = vmatprep.subr.mxu0 0.0
        %692 = vmatpush1.msra.mxu0 0.0
        %693 = vmatprep.subr.mxu0 0.0
        %694 = vmatpush1.msra.mxu0 0.0
        %695 = vmatprep.subr.mxu0 0.0
        %696 = vmatpush1.msra.mxu0 0.0
        %697 = vmatprep.subr.mxu0 0.0
        %698 = vmatpush1.msra.mxu0 0.0
        %699 = vmatprep.subr.mxu0 0.0
        %700 = vmatpush1.msra.mxu0 0.0
        %701 = vmatprep.subr.mxu0 0.0
        %702 = vmatpush1.msra.mxu0 0.0
        %703 = vmatprep.subr.mxu0 0.0
        %704 = vmatpush1.msra.mxu0 0.0
        %705 = vmatprep.subr.mxu0 0.0
        %706 = vmatpush1.msra.mxu0 0.0
        %707 = vmatprep.subr.mxu0 0.0
        %708 = vmatpush1.msra.mxu0 0.0
        %709 = vmatprep.subr.mxu0 0.0
        %710 = vmatpush1.msra.mxu0 0.0
        %711 = vmatprep.subr.mxu0 0.0
        %712 = vmatpush1.msra.mxu0 0.0
        %713 = vmatprep.subr.mxu0 0.0
        %714 = vmatpush1.msra.mxu0 0.0
        %715 = vmatprep.subr.mxu0 0.0
        %716 = vmatpush1.msra.mxu0 0.0
        %717 = vmatprep.subr.mxu0 0.0
        %718 = vmatpush1.msra.mxu0 0.0
        %719 = vmatprep.mubr.f32.mxu0 0.0
        %720 = vmatmul.mubr.f32.gmra.mrb[0].mxu0 %v650
        %v721 = vpop.f32.mrb[0].mxu0
        %v722 = vadd.f32 0.0, %v721
        %v723 = vpop.f32.mrb[0].mxu0
        %724 = vmatprep.mubr.f32.mxu0 0.0
        %725 = vmatmul.mubr.f32.gmra.mrb[0].mxu0 %v653
        %v726 = vpop.f32.mrb[0].mxu0
        %v727 = vadd.f32 0.0, %v726
        %v728 = vpop.f32.mrb[0].mxu0
        %729 = vdwg.mxu0
        %v731 = vlaneseq
        %v732 = vshrl.u32 %v731, 7
        %v733 = vsub.s32 0, %v732
        %v734 = vrot.slane %v624, %v733
        %v737 = vsel %vm534, %v722, 0
        %v740 = vsel %vm534, %v727, 0
        %742 = vmatprep.subr.mxu0 0.0
        %743 = vmatpush1.msra.mxu0 %v622
        %744 = vmatprep.subr.mxu0 0.0
        %745 = vmatpush1.msra.mxu0 %v623
        %746 = vmatprep.subr.mxu0 0.0
        %747 = vmatpush1.msra.mxu0 0.0
        %748 = vmatprep.subr.mxu0 0.0
        %749 = vmatpush1.msra.mxu0 0.0
        %750 = vmatprep.subr.mxu0 0.0
        %751 = vmatpush1.msra.mxu0 0.0
        %752 = vmatprep.subr.mxu0 0.0
        %753 = vmatpush1.msra.mxu0 0.0
        %754 = vmatprep.subr.mxu0 0.0
        %755 = vmatpush1.msra.mxu0 0.0
        %756 = vmatprep.subr.mxu0 0.0
        %757 = vmatpush1.msra.mxu0 0.0
        %758 = vmatprep.subr.mxu0 0.0
        %759 = vmatpush1.msra.mxu0 0.0
        %760 = vmatprep.subr.mxu0 0.0
        %761 = vmatpush1.msra.mxu0 0.0
        %762 = vmatprep.subr.mxu0 0.0
        %763 = vmatpush1.msra.mxu0 0.0
        %764 = vmatprep.subr.mxu0 0.0
        %765 = vmatpush1.msra.mxu0 0.0
        %766 = vmatprep.subr.mxu0 0.0
        %767 = vmatpush1.msra.mxu0 0.0
        %768 = vmatprep.subr.mxu0 0.0
        %769 = vmatpush1.msra.mxu0 0.0
        %770 = vmatprep.subr.mxu0 0.0
        %771 = vmatpush1.msra.mxu0 0.0
        %772 = vmatprep.subr.mxu0 0.0
        %773 = vmatpush1.msra.mxu0 0.0
        %774 = vmatprep.subr.mxu0 0.0
        %775 = vmatpush1.msra.mxu0 0.0
        %776 = vmatprep.subr.mxu0 0.0
        %777 = vmatpush1.msra.mxu0 0.0
        %778 = vmatprep.subr.mxu0 0.0
        %779 = vmatpush1.msra.mxu0 0.0
        %780 = vmatprep.subr.mxu0 0.0
        %781 = vmatpush1.msra.mxu0 0.0
        %782 = vmatprep.subr.mxu0 0.0
        %783 = vmatpush1.msra.mxu0 0.0
        %784 = vmatprep.subr.mxu0 0.0
        %785 = vmatpush1.msra.mxu0 0.0
        %786 = vmatprep.subr.mxu0 0.0
        %787 = vmatpush1.msra.mxu0 0.0
        %788 = vmatprep.subr.mxu0 0.0
        %789 = vmatpush1.msra.mxu0 0.0
        %790 = vmatprep.subr.mxu0 0.0
        %791 = vmatpush1.msra.mxu0 0.0
        %792 = vmatprep.subr.mxu0 0.0
        %793 = vmatpush1.msra.mxu0 0.0
        %794 = vmatprep.subr.mxu0 0.0
        %795 = vmatpush1.msra.mxu0 0.0
        %796 = vmatprep.subr.mxu0 0.0
        %797 = vmatpush1.msra.mxu0 0.0
        %798 = vmatprep.subr.mxu0 0.0
        %799 = vmatpush1.msra.mxu0 0.0
        %800 = vmatprep.subr.mxu0 0.0
        %801 = vmatpush1.msra.mxu0 0.0
        %802 = vmatprep.subr.mxu0 0.0
        %803 = vmatpush1.msra.mxu0 0.0
        %804 = vmatprep.subr.mxu0 0.0
        %805 = vmatpush1.msra.mxu0 0.0
        %806 = vmatprep.mubr.f32.mxu0 0.0
        %807 = vmatmul.mubr.f32.gmra.mrb[0].mxu0 %v737
        %v808 = vpop.f32.mrb[0].mxu0
        %v809 = vadd.f32 %v734, %v808
        %v810 = vpop.f32.mrb[0].mxu0
        %811 = vmatprep.mubr.f32.mxu0 0.0
        %812 = vmatmul.mubr.f32.gmra.mrb[0].mxu0 %v740
        %v813 = vpop.f32.mrb[0].mxu0
        %v814 = vadd.f32 %v734, %v813
        %v815 = vpop.f32.mrb[0].mxu0
        %816 = vdwg.mxu0
        %817 = vst.msk [vmem:[%s275] sm:$0xff] %vm294, %v809
        %818 = vst.msk [vmem:[%s275 + $0x8] sm:$0xff] %vm294, %v814
        %s819 = sand.u32 %s164, 1
        %s820 = scalar_lea.sflag [#allocation3], %s819
        %s821 = sand.u32 %s164, 1
        %s822 = smul.addr %s821, 16
        %s823 = scalar_lea.vmem [#allocation2], %s822
        %s824 = sand.u32 %s190, 1
        %s825 = scalar_lea.sflag [#allocation5], %s824
        %s826 = sand.u32 %s190, 1
        %s827 = smul.addr %s826, 16
        %s828 = scalar_lea.vmem [#allocation4], %s827
        // Predicated region
        $region45: #{tpu_custom_call.1} parent=43 // pred_check
          %p829 = pneg %p174
        $region46: #{tpu_custom_call.1} parent=43 // pred_check_branch
          %831 = sbr.rel (%p829) target = $region48
        $region47: #{tpu_custom_call.1} parent=43 // pred_region
          %s833 = ssub.s32 256, 256
          %834 = vsyncadd %s820, %s833
          %s835 = smul.addr %s25, 2
          %s836 = smul.addr %s835, 128
          %s837 = scalar_lea.hbm %s6, %s836
          %s838 = sshll.u32 %s823, 4
          %s839 = int_to_ptr.vmem [resolvable:$true] %s838
          %844 = dma.vmem_to_hbm [thread:$0]  %s839, 256, %s837, %s820, 128, 128, 8
        $region48: #{tpu_custom_call.1} parent=43 // pred_fallthru
          _
        // Predicated region
        $region49: #{tpu_custom_call.1} parent=43 // pred_check
          %p845 = pneg %p200
        $region50: #{tpu_custom_call.1} parent=43 // pred_check_branch
          %847 = sbr.rel (%p845) target = $region52
        $region51: #{tpu_custom_call.1} parent=43 // pred_region
          %s849 = ssub.s32 256, 256
          %850 = vsyncadd %s825, %s849
          %s851 = smul.addr %s25, 2
          %s852 = smul.addr %s851, 128
          %s853 = scalar_lea.hbm %s7, %s852
          %s854 = sshll.u32 %s828, 4
          %s855 = int_to_ptr.vmem [resolvable:$true] %s854
          %860 = dma.vmem_to_hbm [thread:$0]  %s855, 256, %s853, %s825, 128, 128, 8
        $region52: #{tpu_custom_call.1} parent=43 // pred_fallthru
          _
      $region44: #{tpu_custom_call.1} parent=5 // pred_fallthru
        _
      %p861 = scmp.le.s32.totalorder 2, %s20
      // Predicated region
      $region53: #{tpu_custom_call.1} parent=5 // pred_check
        %p862 = pneg %p861
      $region54: #{tpu_custom_call.1} parent=5 // pred_check_branch
        %864 = sbr.rel (%p862) target = $region56
      $region55: #{tpu_custom_call.1} parent=5 // pred_region
        %s865 = ssub.s32 %s20, 2
        // Predicated region
        $region57: #{tpu_custom_call.1} parent=55 // pred_check
          %p866 = pneg %p180
        $region58: #{tpu_custom_call.1} parent=55 // pred_check_branch
          %868 = sbr.rel (%p866) target = $region60
        $region59: #{tpu_custom_call.1} parent=55 // pred_region
          %s869 = sand.u32 %s165, 1
          %s870 = scalar_lea.sflag [#allocation3], %s869
          %s871 = sand.u32 %s165, 1
          %s872 = smul.addr %s871, 16
          %s873 = scalar_lea.vmem [#allocation2], %s872
          %874 = dma.done %s870, 256
        $region60: #{tpu_custom_call.1} parent=55 // pred_fallthru
          _
        // Predicated region
        $region61: #{tpu_custom_call.1} parent=55 // pred_check
          %p875 = pneg %p206
        $region62: #{tpu_custom_call.1} parent=55 // pred_check_branch
          %877 = sbr.rel (%p875) target = $region64
        $region63: #{tpu_custom_call.1} parent=55 // pred_region
          %s878 = sand.u32 %s191, 1
          %s879 = scalar_lea.sflag [#allocation5], %s878
          %s880 = sand.u32 %s191, 1
          %s881 = smul.addr %s880, 16
          %s882 = scalar_lea.vmem [#allocation4], %s881
          %883 = dma.done %s879, 256
        $region64: #{tpu_custom_call.1} parent=55 // pred_fallthru
          _
      $region56: #{tpu_custom_call.1} parent=5 // pred_fallthru
        _
    $region6: #{tpu_custom_call.1} parent=1 // loop_footer
      %s24 = sadd.s32 1, %s20
    $region7: #{tpu_custom_call.1} parent=1 // loop_footer_branch
      %19 = sbr.rel target = $region3
    $region8: #{tpu_custom_call.1} parent=1 // loop_exit
      _
    %884 = vsyncpa [#allocation3], 1
    %s885 = scalar_lea.sflag [#allocation3], 1
    %886 = vsyncpa %s885, 1
    %887 = vsyncpa [#allocation5], 1
    %s888 = scalar_lea.sflag [#allocation5], 1
    %889 = vsyncpa %s888, 1

</llo_original>
